<compile_context>
chip_gen: v5e
topology: v5e:2x2
jax: 0.10.0
libtpu: 0.0.40
codegen_flags: <defaults>
</compile_context>

<pallas_src>
import functools
import math

import jax
import jax.numpy as jnp
from jax.experimental import pallas as pl
from jax.experimental.pallas import tpu as pltpu


def _cdiv(a, b):
    return -(-a // b)


def _causal_conv1d_kernel(x_cur_ref, x_halo_ref, w_ref, b_ref, o_ref, *,
                          kernel_size, dilation, pad, halo_blk, tile_l):
    # x_cur_ref : (1, C_in, TL)        current L tile of the raw (unpadded) signal
    # x_halo_ref: (1, C_in, HALO_BLK)  the 128-aligned block just left of this tile
    # w_ref     : (C_out, K*C_in)      taps flattened into the contraction dim
    # b_ref     : (C_out, 1)
    # o_ref     : (1, C_out, TL)
    x_cur = x_cur_ref[0]                                        # (C_in, TL)

    if pad > 0:
        j = pl.program_id(1)
        halo = x_halo_ref[0][:, halo_blk - pad:]                # (C_in, pad)
        # First tile: the causal left context is zeros (this IS the Chomp1d /
        # left-pad semantics — no trailing chomp needed afterwards).
        halo = halo * (j > 0).astype(halo.dtype)
        x_win = jnp.concatenate([halo, x_cur], axis=1)          # (C_in, TL + pad)
    else:
        x_win = x_cur

    if kernel_size > 1:
        # Stack the K shifted windows -> single matmul with contraction K*C_in
        # (instead of K tiny C_in-deep matmuls that underfill the MXU).
        taps = [x_win[:, k * dilation: k * dilation + tile_l]
                for k in range(kernel_size)]
        xk = jnp.concatenate(taps, axis=0)                      # (K*C_in, TL)
    else:
        xk = x_win                                              # (C_in, TL)

    acc = jnp.dot(w_ref[...], xk, preferred_element_type=jnp.float32)  # (C_out, TL)
    o_ref[0] = (acc + b_ref[...]).astype(o_ref.dtype)


def causal_conv1d(x, weight, bias, *, dilation=1, tile_l=512):
    """x: (N, C_in, L) -> (N, C_out, L); causal conv, stride=1, groups=1.

    Equivalent to PyTorch Conv1d(padding=(K-1)*dilation) followed by
    Chomp1d((K-1)*dilation).
    """
    n, c_in, length = x.shape
    c_out, c_in_w, k = weight.shape
    assert c_in == c_in_w
    pad = (k - 1) * dilation

    # Halo block: 128-aligned chunk big enough to hold the (K-1)*d left context.
    halo_blk = 128 * max(1, _cdiv(pad, 128))
    # L tile: multiple of halo_blk (so the halo index map is exact), ~tile_l,
    # shrunk for short signals. TL >= halo_blk >= pad always holds.
    tl = halo_blk * max(1, _cdiv(tile_l, halo_blk))
    tl = min(tl, halo_blk * _cdiv(length, halo_blk))
    num_tiles = _cdiv(length, tl)
    l_t = num_tiles * tl

    # Only a small right alignment pad when L is not a multiple of TL
    # (no full-signal causal left pad in HBM).
    x_p = x if l_t == length else jnp.pad(x, ((0, 0), (0, 0), (0, l_t - length)))

    # weight[o, c, k] -> w2[o, k*C_in + c]  (matches tap-major stacking in-kernel)
    w2 = jnp.transpose(weight, (0, 2, 1)).reshape(c_out, k * c_in)
    b2 = bias.reshape(c_out, 1)

    kernel = functools.partial(
        _causal_conv1d_kernel,
        kernel_size=k, dilation=dilation, pad=pad, halo_blk=halo_blk, tile_l=tl,
    )

    halo_per_tile = tl // halo_blk

    out = pl.pallas_call(
        kernel,
        out_shape=jax.ShapeDtypeStruct((n, c_out, l_t), x.dtype),
        grid_spec=pltpu.PrefetchScalarGridSpec(
            num_scalar_prefetch=0,
            grid=(n, num_tiles),
            in_specs=[
                # current L tile
                pl.BlockSpec((1, c_in, tl), lambda b, j: (b, 0, j)),
                # 128-aligned block immediately to the left (clamped at 0;
                # its contribution is zeroed in-kernel for j == 0)
                pl.BlockSpec(
                    (1, c_in, halo_blk),
                    lambda b, j: (b, 0, jnp.maximum(j * halo_per_tile - 1, 0)),
                ),
                # weights / bias: resident across the whole grid
                pl.BlockSpec((c_out, k * c_in), lambda b, j: (0, 0)),
                pl.BlockSpec((c_out, 1), lambda b, j: (0, 0)),
            ],
            out_specs=pl.BlockSpec((1, c_out, tl), lambda b, j: (b, 0, j)),
        ),
        compiler_params=pltpu.CompilerParams(
            dimension_semantics=("parallel", "parallel"),
        ),
        # NOTE: per-step VMEM is ~(C_in + C_out) * TL * 4 B double-buffered,
        # comfortably under the 32 MiB default scoped limit (and v7x's 64 MiB).
    )(x_p, x_p, w2, b2)

    return out if l_t == length else out[:, :, :length]


def _reference(x, weight, bias, *, dilation=1):
    """Pure-JAX reference with exact PyTorch semantics (symmetric pad + chomp)."""
    k = weight.shape[-1]
    pad = (k - 1) * dilation
    y = jax.lax.conv_general_dilated(
        x, weight,
        window_strides=(1,),
        padding=[(pad, pad)],
        rhs_dilation=(dilation,),
        dimension_numbers=("NCH", "OIH", "NCH"),
    )
    y = y + bias.reshape(1, -1, 1)
    return y[:, :, :x.shape[-1]]          # Chomp1d (robust for pad == 0 too)


if __name__ == "__main__":
    key = jax.random.PRNGKey(0)
    kx, kw, kb = jax.random.split(key, 3)

    # Small shapes consistent with the TCN block the module comes from.
    batch, c_in, c_out, length, ksize, dil = 2, 4, 8, 16, 3, 1
    fan_in = c_in * ksize
    bound = 1.0 / math.sqrt(fan_in)
    x = jax.random.normal(kx, (batch, c_in, length), dtype=jnp.float32)
    weight = jax.random.uniform(kw, (c_out, c_in, ksize), jnp.float32, -bound, bound)
    bias = jax.random.uniform(kb, (c_out,), jnp.float32, -bound, bound)

    out = jax.block_until_ready(causal_conv1d(x, weight, bias, dilation=dil))
    ref = _reference(x, weight, bias, dilation=dil)
    assert out.shape == (batch, c_out, length)
    assert jnp.allclose(out, ref, atol=1e-5, rtol=1e-5), "mismatch vs reference (small)"

    # Exercise the multi-tile + cross-tile halo path (dilation > 1, 3 L-tiles).
    length2, dil2 = 384, 2
    x2 = jax.random.normal(kx, (batch, c_in, length2), dtype=jnp.float32)
    out2 = jax.block_until_ready(
        causal_conv1d(x2, weight, bias, dilation=dil2, tile_l=128))
    ref2 = _reference(x2, weight, bias, dilation=dil2)
    assert out2.shape == (batch, c_out, length2)
    assert jnp.allclose(out2, ref2, atol=1e-5, rtol=1e-5), "mismatch vs reference (tiled)"

    print("KERNEL_OK")
</pallas_src>

<mosaic_0001>
module attributes {stable_mosaic.version = 11 : i64} {
  func.func @_causal_conv1d_kernel(%arg0: i32, %arg1: i32, %arg2: memref<1x4x128xf32, #tpu.memory_space<vmem>>, %arg3: memref<1x4x128xf32, #tpu.memory_space<vmem>>, %arg4: memref<8x12xf32, #tpu.memory_space<vmem>>, %arg5: memref<8x1xf32, #tpu.memory_space<vmem>>, %arg6: memref<1x8x128xf32, #tpu.memory_space<vmem>>) attributes {dimension_semantics = [#tpu.dimension_semantics<parallel>, #tpu.dimension_semantics<parallel>], iteration_bounds = array<i64: 2, 1>, scalar_prefetch = 0 : i64, scratch_operands = 0 : i64, tpu.core_type = #tpu.core_type<tc>, window_params = [{transform_indices = @transform_0, window_bounds = array<i64: 1, 4, 128>}, {transform_indices = @transform_1, window_bounds = array<i64: 1, 4, 128>}, {pipeline_mode = #tpu.pipeline_mode<synchronous>, transform_indices = @transform_2, window_bounds = array<i64: 8, 12>}, {pipeline_mode = #tpu.pipeline_mode<synchronous>, transform_indices = @transform_3, window_bounds = array<i64: 8, 1>}, {transform_indices = @transform_4, window_bounds = array<i64: 1, 8, 128>}]} {
    %c0 = arith.constant 0 : index
    %c0_0 = arith.constant 0 : index
    %c0_1 = arith.constant 0 : index
    %0 = vector.load %arg2[%c0, %c0_0, %c0_1] : memref<1x4x128xf32, #tpu.memory_space<vmem>>, vector<1x4x128xf32>
    %1 = vector.shape_cast %0 : vector<1x4x128xf32> to vector<4x128xf32>
    %c0_2 = arith.constant 0 : index
    %c0_3 = arith.constant 0 : index
    %c0_4 = arith.constant 0 : index
    %2 = vector.load %arg3[%c0_2, %c0_3, %c0_4] : memref<1x4x128xf32, #tpu.memory_space<vmem>>, vector<1x4x128xf32>
    %3 = vector.shape_cast %2 : vector<1x4x128xf32> to vector<4x128xf32>
    %4 = vector.extract_strided_slice %3 {offsets = [0, 126], sizes = [4, 2], strides = [1, 1]} : vector<4x128xf32> to vector<4x2xf32>
    %c0_i32 = arith.constant 0 : i32
    %5 = arith.cmpi sgt, %arg1, %c0_i32 : i32
    %6 = arith.extui %5 : i1 to i32
    %7 = arith.sitofp %6 : i32 to f32
    %8 = vector.broadcast %7 : f32 to vector<4x2xf32>
    %9 = arith.mulf %4, %8 : vector<4x2xf32>
    %10 = tpu.concatenate %9, %1 in 1 : vector<4x2xf32>, vector<4x128xf32> -> vector<4x130xf32>
    %11 = vector.extract_strided_slice %10 {offsets = [0, 0], sizes = [4, 128], strides = [1, 1]} : vector<4x130xf32> to vector<4x128xf32>
    %12 = vector.extract_strided_slice %10 {offsets = [0, 1], sizes = [4, 128], strides = [1, 1]} : vector<4x130xf32> to vector<4x128xf32>
    %13 = vector.extract_strided_slice %10 {offsets = [0, 2], sizes = [4, 128], strides = [1, 1]} : vector<4x130xf32> to vector<4x128xf32>
    %14 = tpu.concatenate %11, %12, %13 in 0 : vector<4x128xf32>, vector<4x128xf32>, vector<4x128xf32> -> vector<12x128xf32>
    %c0_5 = arith.constant 0 : index
    %c0_6 = arith.constant 0 : index
    %15 = vector.load %arg4[%c0_5, %c0_6] : memref<8x12xf32, #tpu.memory_space<vmem>>, vector<8x12xf32>
    %cst = arith.constant dense<0.000000e+00> : vector<8x128xf32>
    %16 = tpu.matmul %15, %14, %cst {dimension_numbers = #tpu.dot_dimension_numbers<[1], [0], [0], [1], [0, 0, 1, 1], [], []>} : vector<8x12xf32>, vector<12x128xf32>, vector<8x128xf32> -> vector<8x128xf32>
    %c0_7 = arith.constant 0 : index
    %c0_8 = arith.constant 0 : index
    %17 = vector.load %arg5[%c0_7, %c0_8] : memref<8x1xf32, #tpu.memory_space<vmem>>, vector<8x1xf32>
    %18 = vector.broadcast %17 : vector<8x1xf32> to vector<8x128xf32>
    %19 = arith.addf %16, %18 : vector<8x128xf32>
    %c0_9 = arith.constant 0 : index
    %c0_10 = arith.constant 0 : index
    %c0_11 = arith.constant 0 : index
    %20 = vector.load %arg6[%c0_9, %c0_10, %c0_11] : memref<1x8x128xf32, #tpu.memory_space<vmem>>, vector<1x8x128xf32>
    %21 = vector.shape_cast %20 : vector<1x8x128xf32> to vector<8x128xf32>
    %22 = vector.shape_cast %19 : vector<8x128xf32> to vector<1x8x128xf32>
    tpu.vector_store %arg6[%c0_9, %c0_10, %c0_11], %22 {strides = array<i32>} : memref<1x8x128xf32, #tpu.memory_space<vmem>>, vector<1x8x128xf32>,
    return
  }
  func.func @transform_0(%arg0: i32, %arg1: i32) -> (i32, i32, i32) {
    %c0_i32 = arith.constant 0 : i32
    %c0_i32_0 = arith.constant 0 : i32
    return %arg0, %c0_i32, %arg1 : i32, i32, i32
  }
  func.func @transform_1(%arg0: i32, %arg1: i32) -> (i32, i32, i32) {
    %c1_i32 = arith.constant 1 : i32
    %0 = arith.muli %arg1, %c1_i32 : i32
    %c1_i32_0 = arith.constant 1 : i32
    %1 = arith.subi %0, %c1_i32_0 : i32
    %c0_i32 = arith.constant 0 : i32
    %2 = arith.maxsi %1, %c0_i32 : i32
    %c0_i32_1 = arith.constant 0 : i32
    %c0_i32_2 = arith.constant 0 : i32
    return %arg0, %c0_i32_1, %2 : i32, i32, i32
  }
  func.func @transform_2(%arg0: i32, %arg1: i32) -> (i32, i32) {
    %c0_i32 = arith.constant 0 : i32
    %c0_i32_0 = arith.constant 0 : i32
    %c0_i32_1 = arith.constant 0 : i32
    return %c0_i32, %c0_i32_0 : i32, i32
  }
  func.func @transform_3(%arg0: i32, %arg1: i32) -> (i32, i32) {
    %c0_i32 = arith.constant 0 : i32
    %c0_i32_0 = arith.constant 0 : i32
    %c0_i32_1 = arith.constant 0 : i32
    return %c0_i32, %c0_i32_0 : i32, i32
  }
  func.func @transform_4(%arg0: i32, %arg1: i32) -> (i32, i32, i32) {
    %c0_i32 = arith.constant 0 : i32
    %c0_i32_0 = arith.constant 0 : i32
    return %arg0, %c0_i32, %arg1 : i32, i32, i32
  }
}

</mosaic_0001>

<llo_original>
// kernel: tpu_custom_call.1
$region0: #{tpu_custom_call.1}
  #allocation0 [shape = 'u32[]', space=smem, size = 0x4, offset = 0x4, fixed_abs, tag = 'smem constant byte address 0x4 - core index']
  #allocation1 [shape = 'u32[72,128]{1,0:T(1,128)}', space=vmem, size = 0x9000, scoped, tag = 'internal scratch']
  %s0 = inlined_call_operand.vmem [shape: f32[2,4,128], index: 0, kind: input, shape index: {}]
  %s1 = inlined_call_operand.hbm [shape: f32[2,4,128], index: 1, kind: input, shape index: {}]
  %s2 = inlined_call_operand.hbm [shape: f32[8,12], index: 2, kind: input, shape index: {}]
  %s3 = inlined_call_operand.vmem [shape: f32[8,1], index: 3, kind: input, shape index: {}]
  %s4 = inlined_call_operand.hbm [shape: f32[2,8,128], index: 4, kind: output, shape index: {}]
  %s5 = sld [smem:[#allocation0]]
  $region57: #{tpu_custom_call.1} parent=0
    _
  %s7 = ssub.s32 1, %s5
  %s8 = scalar_select 0, %s7, %s5
  $region1: #{tpu_custom_call.1} parent=0
    #allocation2 [shape = 'u8[4096]{0}', space=vmem, size = 0x1000, scoped, tag = 'input window, operand 1']
    #allocation3 [shape = 's32[2]{0}', space=sflag, size = 0x8, scoped, tag = 'scoped memory for tpu_custom_call.1']
    #allocation4 [shape = 's32[2]{0}', space=sflag, size = 0x8, scoped, tag = 'scoped memory for tpu_custom_call.1']
    #allocation5 [shape = 'u8[4096]{0}', space=vmem, size = 0x1000, scoped, tag = 'input window, operand 2, single buffered']
    #allocation6 [shape = 's32[1]{0}', space=sflag, size = 0x4, scoped, tag = 'scoped memory for tpu_custom_call.1']
    #allocation7 [shape = 'u8[8192]{0}', space=vmem, size = 0x2000, scoped, tag = 'output window, operand 0']
    %9 = vsyncpa [#allocation3], 0
    %s10 = scalar_lea.sflag [#allocation3], 1
    %11 = vsyncpa %s10, 0
    %12 = vsyncpa [#allocation6], 0
    %13 = vsyncpa [#allocation4], 0
    %s14 = scalar_lea.sflag [#allocation4], 1
    %15 = vsyncpa %s14, 0
    loop: start=0, step=1, limit=4
    $region2: #{tpu_custom_call.1} parent=1 // loop_pre_header
      _
    $region3: #{tpu_custom_call.1} parent=1 // loop_header
      %s17 = sphi 0, %s21
      %p18 = scmp.ge.s32.totalorder %s17, 4
      %s24 = sphi 0, %s36
      %s25 = sphi 0, %s32
      %s26 = sphi 0, %s24
      %s27 = sphi 0, %s25
      %s28 = sphi 0, %s26
      %s29 = sphi 0, %s27
      %s41 = sphi 0, %s43
      %s44 = sphi 0, %s41
      %s45 = sphi 0, %s44
      %s61 = sphi 0, %s45
      %s75 = sphi 0, %s77
      %s78 = sphi 0, %s75
      %s79 = sphi 0, %s78
      %s95 = sphi 0, %s79
      %s99 = sphi 0, %s99
      %s101 = sphi 0, %s99
      %s102 = sphi 0, %s101
      %s116 = sphi 0, %s102
      %s120 = sphi 0, %s120
      %s122 = sphi 0, %s120
      %s123 = sphi 0, %s122
      %s137 = sphi 0, %s123
      %s145 = sphi 0, %s147
      %s148 = sphi 0, %s145
      %s149 = sphi 0, %s148
      %s165 = sphi 0, %s149
    $region4: #{tpu_custom_call.1} parent=1 // loop_header_branch
      %20 = sbr.rel (%p18) target = $region8
    $region5: #{tpu_custom_call.1} parent=1 // loop_body
      %s22 = ssub.s32 %s17, 1
      %s23 = ssub.s32 %s17, 2
      %s30 = sadd.s32 1, %s25
      %p31 = scmp.ge.s32.totalorder %s30, 1
      %s32 = scalar_select %p31, 0, %s30
      %s33 = sadd.s32 1, %s24
      %s34 = scalar_select %p31, %s33, %s24
      %p35 = scmp.ge.s32.totalorder %s34, 2
      %s36 = scalar_select %p35, 0, %s34
      %s37 = ssub.s32 %s24, %s36
      %s38 = ssub.s32 %s25, %s32
      %s39 = sor.u32 %s37, %s38
      %p40 = scmp.eq.s32.totalorder %s39, 0
      %s42 = sadd.s32 %s41, 1
      %s43 = scalar_select %p40, %s41, %s42
      %p46 = pneg %p40
      %p47 = scmp.eq.s32.totalorder %s17, 1
      %p48 = por %p46, %p47
      %p49 = scmp.ne.s32.totalorder %s41, %s44
      %p50 = scmp.eq.s32.totalorder %s17, 0
      %p51 = por %p49, %p50
      %p52 = scmp.ne.s32.totalorder %s41, %s44
      %p53 = scmp.eq.s32.totalorder %s22, 1
      %p54 = por %p52, %p53
      %p55 = scmp.ne.s32.totalorder %s44, %s45
      %p56 = scmp.eq.s32.totalorder %s22, 0
      %p57 = por %p55, %p56
      %p58 = scmp.ne.s32.totalorder %s44, %s45
      %p59 = scmp.eq.s32.totalorder %s23, 1
      %p60 = por %p58, %p59
      %p62 = scmp.ne.s32.totalorder %s45, %s61
      %p63 = scmp.eq.s32.totalorder %s23, 0
      %p64 = por %p62, %p63
      %s65 = ssub.s32 %s25, 1
      %p66 = scmp.gt.s32.totalorder %s65, 0
      %s67 = scalar_select %p66, %s65, 0
      %s68 = ssub.s32 %s32, 1
      %p69 = scmp.gt.s32.totalorder %s68, 0
      %s70 = scalar_select %p69, %s68, 0
      %s71 = ssub.s32 %s24, %s36
      %s72 = ssub.s32 %s67, %s70
      %s73 = sor.u32 %s71, %s72
      %p74 = scmp.eq.s32.totalorder %s73, 0
      %s76 = sadd.s32 %s75, 1
      %s77 = scalar_select %p74, %s75, %s76
      %p80 = pneg %p74
      %p81 = scmp.eq.s32.totalorder %s17, 1
      %p82 = por %p80, %p81
      %p83 = scmp.ne.s32.totalorder %s75, %s78
      %p84 = scmp.eq.s32.totalorder %s17, 0
      %p85 = por %p83, %p84
      %p86 = scmp.ne.s32.totalorder %s75, %s78
      %p87 = scmp.eq.s32.totalorder %s22, 1
      %p88 = por %p86, %p87
      %p89 = scmp.ne.s32.totalorder %s78, %s79
      %p90 = scmp.eq.s32.totalorder %s22, 0
      %p91 = por %p89, %p90
      %p92 = scmp.ne.s32.totalorder %s78, %s79
      %p93 = scmp.eq.s32.totalorder %s23, 1
      %p94 = por %p92, %p93
      %p96 = scmp.ne.s32.totalorder %s79, %s95
      %p97 = scmp.eq.s32.totalorder %s23, 0
      %p98 = por %p96, %p97
      %s100 = sadd.s32 %s99, 1
      %p103 = scmp.eq.s32.totalorder %s17, 1
      %p104 = scmp.ne.s32.totalorder %s99, %s101
      %p105 = scmp.eq.s32.totalorder %s17, 0
      %p106 = por %p104, %p105
      %p107 = scmp.ne.s32.totalorder %s99, %s101
      %p108 = scmp.eq.s32.totalorder %s22, 1
      %p109 = por %p107, %p108
      %p110 = scmp.ne.s32.totalorder %s101, %s102
      %p111 = scmp.eq.s32.totalorder %s22, 0
      %p112 = por %p110, %p111
      %p113 = scmp.ne.s32.totalorder %s101, %s102
      %p114 = scmp.eq.s32.totalorder %s23, 1
      %p115 = por %p113, %p114
      %p117 = scmp.ne.s32.totalorder %s102, %s116
      %p118 = scmp.eq.s32.totalorder %s23, 0
      %p119 = por %p117, %p118
      %s121 = sadd.s32 %s120, 1
      %p124 = scmp.eq.s32.totalorder %s17, 1
      %p125 = scmp.ne.s32.totalorder %s120, %s122
      %p126 = scmp.eq.s32.totalorder %s17, 0
      %p127 = por %p125, %p126
      %p128 = scmp.ne.s32.totalorder %s120, %s122
      %p129 = scmp.eq.s32.totalorder %s22, 1
      %p130 = por %p128, %p129
      %p131 = scmp.ne.s32.totalorder %s122, %s123
      %p132 = scmp.eq.s32.totalorder %s22, 0
      %p133 = por %p131, %p132
      %p134 = scmp.ne.s32.totalorder %s122, %s123
      %p135 = scmp.eq.s32.totalorder %s23, 1
      %p136 = por %p134, %p135
      %p138 = scmp.ne.s32.totalorder %s123, %s137
      %p139 = scmp.eq.s32.totalorder %s23, 0
      %p140 = por %p138, %p139
      %s141 = ssub.s32 %s24, %s36
      %s142 = ssub.s32 %s25, %s32
      %s143 = sor.u32 %s141, %s142
      %p144 = scmp.eq.s32.totalorder %s143, 0
      %s146 = sadd.s32 %s145, 1
      %s147 = scalar_select %p144, %s145, %s146
      %p150 = pneg %p144
      %p151 = scmp.eq.s32.totalorder %s17, 1
      %p152 = por %p150, %p151
      %p153 = scmp.ne.s32.totalorder %s145, %s148
      %p154 = scmp.eq.s32.totalorder %s17, 0
      %p155 = por %p153, %p154
      %p156 = scmp.ne.s32.totalorder %s145, %s148
      %p157 = scmp.eq.s32.totalorder %s22, 1
      %p158 = por %p156, %p157
      %p159 = scmp.ne.s32.totalorder %s148, %s149
      %p160 = scmp.eq.s32.totalorder %s22, 0
      %p161 = por %p159, %p160
      %p162 = scmp.ne.s32.totalorder %s148, %s149
      %p163 = scmp.eq.s32.totalorder %s23, 1
      %p164 = por %p162, %p163
      %p166 = scmp.ne.s32.totalorder %s149, %s165
      %p167 = scmp.eq.s32.totalorder %s23, 0
      %p168 = por %p166, %p167
      %p169 = scmp.le.s32.totalorder 1, %s17
      %p170 = scmp.lt.s32.totalorder %s17, 3
      %p171 = pnand %p169, %p170
      %p172 = pneg %p171
      // Predicated region
      $region9: #{tpu_custom_call.1} parent=5 // pred_check
        _
      $region10: #{tpu_custom_call.1} parent=5 // pred_check_branch
        %174 = sbr.rel (%p171) target = $region12
      $region11: #{tpu_custom_call.1} parent=5 // pred_region
        %s175 = ssub.s32 %s17, 1
        // Predicated region
        $region13: #{tpu_custom_call.1} parent=11 // pred_check
          %p176 = pneg %p112
        $region14: #{tpu_custom_call.1} parent=11 // pred_check_branch
          %178 = sbr.rel (%p176) target = $region16
        $region15: #{tpu_custom_call.1} parent=11 // pred_region
          %180 = vsyncadd [#allocation6], 0
          %s182 = sshll.u32 %s2, 4
          %s183 = int_to_ptr.hbm [resolvable:$true] %s182
          %s184 = sshll.u32 [#allocation5], 4
          %s185 = int_to_ptr.vmem [resolvable:$true] %s184
          %187 = dma.hbm_to_vmem [thread:$0]  %s183, 128, %s185, [#allocation6]
        $region16: #{tpu_custom_call.1} parent=11 // pred_fallthru
          _
        // Predicated region
        $region17: #{tpu_custom_call.1} parent=11 // pred_check
          %p188 = pneg %p133
        $region18: #{tpu_custom_call.1} parent=11 // pred_check_branch
          %190 = sbr.rel (%p188) target = $region20
        $region19: #{tpu_custom_call.1} parent=11 // pred_region
          _
        $region20: #{tpu_custom_call.1} parent=11 // pred_fallthru
          _
      $region12: #{tpu_custom_call.1} parent=5 // pred_fallthru
        _
      %p191 = scmp.lt.s32.totalorder %s17, 2
      // Predicated region
      $region21: #{tpu_custom_call.1} parent=5 // pred_check
        %p192 = pneg %p191
      $region22: #{tpu_custom_call.1} parent=5 // pred_check_branch
        %194 = sbr.rel (%p192) target = $region24
      $region23: #{tpu_custom_call.1} parent=5 // pred_region
        // Predicated region
        $region25: #{tpu_custom_call.1} parent=23 // pred_check
          %p195 = pneg %p51
        $region26: #{tpu_custom_call.1} parent=23 // pred_check_branch
          %197 = sbr.rel (%p195) target = $region28
        $region27: #{tpu_custom_call.1} parent=23 // pred_region
          %p198 = scmp.lt.s32.totalorder %s24, 1
          %s199 = scalar_select %p198, %s24, 1
          %p200 = scmp.lt.s32.totalorder %s25, 0
          %s201 = scalar_select %p200, %s25, 0
          %s202 = sadd.s32 %s201, %s199
          %s203 = smul.addr %s202, 4
          %s204 = scalar_lea.vmem %s0, %s203
        $region28: #{tpu_custom_call.1} parent=23 // pred_fallthru
          _
        // Predicated region
        $region29: #{tpu_custom_call.1} parent=23 // pred_check
          %p205 = pneg %p85
        $region30: #{tpu_custom_call.1} parent=23 // pred_check_branch
          %207 = sbr.rel (%p205) target = $region32
        $region31: #{tpu_custom_call.1} parent=23 // pred_region
          %s208 = sand.u32 %s75, 1
          %s209 = scalar_lea.sflag [#allocation3], %s208
          %s210 = sand.u32 %s75, 1
          %s211 = smul.addr %s210, 4
          %s212 = scalar_lea.vmem [#allocation2], %s211
          %s213 = ssub.s32 %s25, 1
          %p214 = scmp.gt.s32.totalorder %s213, 0
          %s215 = scalar_select %p214, %s213, 0
          %217 = vsyncadd %s209, 0
          %s218 = sadd.s32 %s215, %s24
          %s219 = smul.addr %s218, 4
          %s220 = scalar_lea.hbm %s1, %s219
          %s222 = sshll.u32 %s220, 4
          %s223 = int_to_ptr.hbm [resolvable:$true] %s222
          %s224 = sshll.u32 %s212, 4
          %s225 = int_to_ptr.vmem [resolvable:$true] %s224
          %227 = dma.hbm_to_vmem [thread:$0]  %s223, 64, %s225, %s209
        $region32: #{tpu_custom_call.1} parent=23 // pred_fallthru
          _
      $region24: #{tpu_custom_call.1} parent=5 // pred_fallthru
        _
      %p228 = scmp.le.s32.totalorder 1, %s17
      %p229 = scmp.lt.s32.totalorder %s17, 3
      %p230 = pnand %p228, %p229
      %p231 = pneg %p230
      // Predicated region
      $region33: #{tpu_custom_call.1} parent=5 // pred_check
        _
      $region34: #{tpu_custom_call.1} parent=5 // pred_check_branch
        %233 = sbr.rel (%p230) target = $region36
      $region35: #{tpu_custom_call.1} parent=5 // pred_region
        %s234 = ssub.s32 %s17, 1
        %s235 = sand.u32 %s78, 1
        %s236 = scalar_lea.sflag [#allocation3], %s235
        %s237 = sand.u32 %s78, 1
        %s238 = smul.addr %s237, 4
        %s239 = scalar_lea.vmem [#allocation2], %s238
        // Predicated region
        $region37: #{tpu_custom_call.1} parent=35 // pred_check
          %p240 = pneg %p91
        $region38: #{tpu_custom_call.1} parent=35 // pred_check_branch
          %242 = sbr.rel (%p240) target = $region40
        $region39: #{tpu_custom_call.1} parent=35 // pred_region
          %244 = dma.done %s236, 64
        $region40: #{tpu_custom_call.1} parent=35 // pred_fallthru
          _
        // Predicated region
        $region41: #{tpu_custom_call.1} parent=35 // pred_check
          %p245 = pneg %p112
        $region42: #{tpu_custom_call.1} parent=35 // pred_check_branch
          %247 = sbr.rel (%p245) target = $region44
        $region43: #{tpu_custom_call.1} parent=35 // pred_region
          %249 = dma.done [#allocation6], 128
        $region44: #{tpu_custom_call.1} parent=35 // pred_fallthru
          _
        %p250 = scmp.lt.s32.totalorder %s26, 1
        %s251 = scalar_select %p250, %s26, 1
        %p252 = scmp.lt.s32.totalorder %s27, 0
        %s253 = scalar_select %p252, %s27, 0
        %s254 = sadd.s32 %s253, %s251
        %s255 = smul.addr %s254, 4
        %s256 = scalar_lea.vmem %s0, %s255
        %p257 = pneg %p57
        %p258 = pneg %p54
        %s259 = sand.u32 %s78, 1
        %s260 = scalar_lea.sflag [#allocation3], %s259
        %s261 = sand.u32 %s78, 1
        %s262 = smul.addr %s261, 4
        %s263 = scalar_lea.vmem [#allocation2], %s262
        %p264 = pneg %p91
        %p265 = pneg %p88
        %p266 = pneg %p112
        %p267 = pneg %p109
        %p268 = pneg %p133
        %p269 = pneg %p130
        %p270 = pneg %p161
        %p271 = pneg %p158
        %s272 = sand.u32 %s148, 1
        %s273 = scalar_lea.sflag [#allocation4], %s272
        %s274 = sand.u32 %s148, 1
        %s275 = smul.addr %s274, 8
        %s276 = scalar_lea.vmem [#allocation7], %s275
        %p277 = scmp.lt.s32.totalorder %s26, 1
        %s278 = scalar_select %p277, %s26, 1
        %p279 = scmp.lt.s32.totalorder %s27, 0
        %s280 = scalar_select %p279, %s27, 0
        %s281 = sadd.s32 %s280, %s278
        %s282 = smul.addr %s281, 4
        %s283 = scalar_lea.vmem %s0, %s282
        %s284 = ssub.s32 %s27, 1
        %p285 = scmp.gt.s32.totalorder %s284, 0
        %s286 = scalar_select %p285, %s284, 0
        %v287 = vld [vmem:[%s283] sm:$0xf]
        %v288 = vld [vmem:[%s239] sm:$0xf]
        %p289 = scmp.gt.s32.totalorder %s27, 0
        %s290 = scalar_select %p289, 1, 0
        %s291 = scvt.s32.f32 %s290
        %v292 = vstv %s291
        %v293 = vmul.f32 %v288, %v292
        %295 = vrot.lane.b32.xlu0 %v293, 2
        %v296 = vpop.permute.xlu0 %295
        %299 = vrot.lane.b32.xlu0 %v287, 2
        %v300 = vpop.permute.xlu0 %299
        %vm302 = vcmask 15360
        %v303 = vsel %vm302, %v296, %v300
        %v305 = vrot.slane %v303, 4
        %v306 = vrot.slane %v300, 4
        %307 = vrot.lane.b32.xlu0 %v305, 127
        %v308 = vpop.permute.xlu0 %307
        %309 = vrot.lane.b32.xlu0 %v306, 127
        %v310 = vpop.permute.xlu0 %309
        %vm311 = vcmask 1039360
        %v312 = vsel %vm311, %v308, %v310
        %314 = vrot.lane.b32.xlu0 %v303, 126
        %v315 = vpop.permute.xlu0 %314
        %316 = vrot.lane.b32.xlu0 %v300, 126
        %v317 = vpop.permute.xlu0 %316
        %vm318 = vcmask 1031168
        %v319 = vsel %vm318, %v315, %v317
        %vm320 = vcmask 1043456
        %v321 = vsel %vm320, %v303, %v312
        %v322 = vld [vmem:[#allocation5] sm:$0xff]
        %v323 = vld [vmem:[%s3] sm:$0xff]
        %325 = vset.pattern.permute.xlu0 0
        %326 = vperm.xlu0 %325, %v323
        %v327 = vpop.permute.xlu0 %326
        %vm329 = vcmask 97280
        %v331 = vsel %vm329, %v322, 0
        %v333 = vsel %vm320, %v319, 0
        %335 = vmatpush.msra.mxu0 0.0
        %336 = vmatpush.msra.mxu0 0.0
        %337 = vmatpush.msra.mxu0 0.0
        %338 = vmatpush.msra.mxu0 0.0
        %339 = vmatpush.msra.mxu0 0.0
        %340 = vmatpush.msra.mxu0 0.0
        %341 = vmatpush.msra.mxu0 0.0
        %342 = vmatpush.msra.mxu0 0.0
        %343 = vmatpush.msra.mxu0 0.0
        %344 = vmatpush.msra.mxu0 0.0
        %345 = vmatpush.msra.mxu0 0.0
        %346 = vmatpush.msra.mxu0 0.0
        %347 = vmatpush.msra.mxu0 0.0
        %348 = vmatpush.msra.mxu0 0.0
        %349 = vmatpush.msra.mxu0 %v333
        %350 = vmatpush.msra.mxu0 %v321
        %351 = vmatmul.f32.gmra.mxu0 %v331
        %v352 = vpop.f32.mrf.mxu0
        %v353 = vadd.f32 %v327, %v352
        %354 = vdwg.mxu0
        %355 = vst [vmem:[%s276] sm:$0xff] %v353
        %s356 = sand.u32 %s148, 1
        %s357 = scalar_lea.sflag [#allocation4], %s356
        %s358 = sand.u32 %s148, 1
        %s359 = smul.addr %s358, 8
        %s360 = scalar_lea.vmem [#allocation7], %s359
        // Predicated region
        $region45: #{tpu_custom_call.1} parent=35 // pred_check
          %p361 = pneg %p158
        $region46: #{tpu_custom_call.1} parent=35 // pred_check_branch
          %363 = sbr.rel (%p361) target = $region48
        $region47: #{tpu_custom_call.1} parent=35 // pred_region
          %365 = vsyncadd %s357, 0
          %s366 = sadd.s32 %s27, %s26
          %s367 = smul.addr %s366, 8
          %s368 = scalar_lea.hbm %s4, %s367
          %s370 = sshll.u32 %s360, 4
          %s371 = int_to_ptr.vmem [resolvable:$true] %s370
          %s372 = sshll.u32 %s368, 4
          %s373 = int_to_ptr.hbm [resolvable:$true] %s372
          %375 = dma.vmem_to_hbm [thread:$0]  %s371, 128, %s373, %s357
        $region48: #{tpu_custom_call.1} parent=35 // pred_fallthru
          _
      $region36: #{tpu_custom_call.1} parent=5 // pred_fallthru
        _
      %p376 = scmp.le.s32.totalorder 2, %s17
      // Predicated region
      $region49: #{tpu_custom_call.1} parent=5 // pred_check
        %p377 = pneg %p376
      $region50: #{tpu_custom_call.1} parent=5 // pred_check_branch
        %379 = sbr.rel (%p377) target = $region52
      $region51: #{tpu_custom_call.1} parent=5 // pred_region
        %s380 = ssub.s32 %s17, 2
        // Predicated region
        $region53: #{tpu_custom_call.1} parent=51 // pred_check
          %p381 = pneg %p164
        $region54: #{tpu_custom_call.1} parent=51 // pred_check_branch
          %383 = sbr.rel (%p381) target = $region56
        $region55: #{tpu_custom_call.1} parent=51 // pred_region
          %s384 = sand.u32 %s149, 1
          %s385 = scalar_lea.sflag [#allocation4], %s384
          %s386 = sand.u32 %s149, 1
          %s387 = smul.addr %s386, 8
          %s388 = scalar_lea.vmem [#allocation7], %s387
          %390 = dma.done %s385, 128
        $region56: #{tpu_custom_call.1} parent=51 // pred_fallthru
          _
      $region52: #{tpu_custom_call.1} parent=5 // pred_fallthru
        _
    $region6: #{tpu_custom_call.1} parent=1 // loop_footer
      %s21 = sadd.s32 1, %s17
    $region7: #{tpu_custom_call.1} parent=1 // loop_footer_branch
      %16 = sbr.rel target = $region3
    $region8: #{tpu_custom_call.1} parent=1 // loop_exit
      _
    %391 = vsyncpa [#allocation3], 1
    %s392 = scalar_lea.sflag [#allocation3], 1
    %393 = vsyncpa %s392, 1
    %394 = vsyncpa [#allocation6], 1
    %395 = vsyncpa [#allocation4], 1
    %s396 = scalar_lea.sflag [#allocation4], 1
    %397 = vsyncpa %s396, 1

</llo_original>
